<compile_context>
chip_gen: v5e
topology: v5e:2x2
jax: 0.10.0
libtpu: 0.0.40
codegen_flags: <defaults>
</compile_context>

<pallas_src>
import numpy as np
import jax
import jax.numpy as jnp
from jax.experimental import pallas as pl
from jax.experimental.pallas import tpu as pltpu

# ------------------------- model hyper-parameters ---------------------------
B = 2           # batch
N = 8           # number of nodes
N_IN = 16       # n_in
N_HID = 32      # n_hid
HEAD = 4        # head
N_HEAD_DIM = 8  # n_head_dim
HD = HEAD * N_HEAD_DIM          # 32
BN_EPS = 1e-5
LANES = 2 * HD                  # 64: common lane width of the packed slab

# Packed-slab row offsets (all multiples of 8 -> sublane-aligned slices).
R_W1 = 0                        # (N_IN,  N_HID)  rows  0:16, lanes 0:32
R_W2 = R_W1 + N_IN              # (N_HID, N_HID)  rows 16:48, lanes 0:32
R_WQK = R_W2 + N_HID            # (N_HID, 2*HD)   rows 48:80, lanes 0:64
R_VEC = R_WQK + N_HID           # (8, 64) vectors rows 80:88
R_MASK = R_VEC + 8              # (HEAD*N, HD)    rows 88:120 block-diag mask
SLAB_ROWS = R_MASK + HEAD * N   # 120

_HP = jax.lax.Precision.HIGHEST


def _elu(x):
    # PyTorch F.elu (alpha=1.0); clamp the exp argument so the discarded
    # positive branch never produces transient inf on the EUP.
    return jnp.where(x > 0, x, jnp.exp(jnp.minimum(x, 0.0)) - 1.0)


# ----------------------------- fused kernel ----------------------------------
def graph_learner_kernel(x_ref, p_ref, o_ref):
    # x_ref: (B*N, N_IN) flattened rows; p_ref: (120, 64) packed params.
    x = x_ref[...]

    # --- unpack the parameter slab (static, aligned slices) ------------------
    w1 = p_ref[R_W1:R_W1 + N_IN, 0:N_HID]            # (16, 32)
    w2 = p_ref[R_W2:R_W2 + N_HID, 0:N_HID]           # (32, 32)
    wqk = p_ref[R_WQK:R_WQK + N_HID, 0:2 * HD]       # (32, 64) = [Wq | Wk]
    vec = p_ref[R_VEC:R_VEC + 8, :]                  # (8, 64) bias/bn vectors
    b1 = vec[0:1, 0:N_HID]
    b2 = vec[1:2, 0:N_HID]
    gamma = vec[2:3, 0:N_HID]
    beta = vec[3:4, 0:N_HID]
    bqk = vec[4:5, 0:2 * HD]
    mask = p_ref[R_MASK:R_MASK + HEAD * N, 0:HD]     # (32, 32) block-diag mask

    # --- MLP: fc1 -> ELU -> (dropout p=0 == identity) -> fc2 -> ELU ----------
    h1 = _elu(jnp.dot(x, w1, preferred_element_type=jnp.float32,
                      precision=_HP) + b1)
    h2 = _elu(jnp.dot(h1, w2, preferred_element_type=jnp.float32,
                      precision=_HP) + b2)

    # BatchNorm1d over the B*N rows, per-feature, biased variance
    # (training-mode batch statistics = PyTorch nn.Module default mode).
    # TODO(synk): eval-mode running statistics are not modeled here.
    mean = jnp.mean(h2, axis=0, keepdims=True)
    var = jnp.mean((h2 - mean) ** 2, axis=0, keepdims=True)
    xn = (h2 - mean) * jax.lax.rsqrt(var + BN_EPS) * gamma + beta

    # Fused Wq|Wk projection: one (B*N, 2*HD) matmul.
    qk = jnp.dot(xn, wqk, preferred_element_type=jnp.float32,
                 precision=_HP) + bqk                # (16, 64): [:HD]=q, [HD:]=k

    # --- per-batch scores via ONE block-diagonal matmul each ------------------
    # K_bd[h*N + j, d] = k_b[j, d] * (d // D == h); then
    # s_b[i, h*N + j] = sum_d q_b[i, d] * K_bd[h*N + j, d]
    #                 = sum_{d in head h} q_b[i, d] * k_b[j, d]  == probs[b,h,i,j]
    for b in range(B):
        q_b = qk[b * N:(b + 1) * N, 0:HD]                     # (8, 32)
        k_b = qk[b * N:(b + 1) * N, HD:2 * HD]                # (8, 32)
        k_bd = jnp.concatenate([k_b] * HEAD, axis=0) * mask   # (32, 32)
        s_b = jax.lax.dot_general(
            q_b, k_bd,
            dimension_numbers=(((1,), (1,)), ((), ())),
            preferred_element_type=jnp.float32,
            precision=_HP)                                    # (8, HEAD*N)
        # Output rows are in (b, h, i) order -> wrapper needs only a reshape.
        for h in range(HEAD):
            r0 = (b * HEAD + h) * N
            o_ref[r0:r0 + N, :] = s_b[:, h * N:(h + 1) * N]


# ------------------------------ wrapper ---------------------------------------
_FLOPS = 2 * (B * N) * (N_IN * N_HID + N_HID * N_HID + N_HID * 2 * HD) \
         + 2 * B * N * HD * (HEAD * N)
_BYTES = (B * N * N_IN + SLAB_ROWS * LANES + B * HEAD * N * N) * 4
_TRANS = 2 * (B * N) * N_HID


def _forward_impl(inputs, param_slab):
    """inputs: (B, N, n_in) f32, param_slab: (120, 64) f32 -> (B, head, N, N)."""
    x_flat = inputs.reshape(B * N, N_IN)
    vmem = pl.BlockSpec(memory_space=pltpu.MemorySpace.VMEM)
    out = pl.pallas_call(
        graph_learner_kernel,
        out_shape=jax.ShapeDtypeStruct((B * HEAD * N, N), jnp.float32),
        in_specs=[vmem, vmem],
        out_specs=vmem,
        cost_estimate=pl.CostEstimate(flops=_FLOPS,
                                      transcendentals=_TRANS,
                                      bytes_accessed=_BYTES),
    )(x_flat, param_slab)
    # Row order is (b, h, i) with lanes = j -> pure-metadata reshape, no transpose.
    return out.reshape(B, HEAD, N, N)


graph_learner_forward = jax.jit(_forward_impl)


# --------------------------- pure-JAX reference --------------------------------
def graph_learner_reference(inputs, params):
    hp = jax.lax.Precision.HIGHEST
    x = inputs.reshape(B * N, N_IN)
    h1 = jax.nn.elu(jnp.dot(x, params["w1"], precision=hp) + params["b1"])
    h2 = jax.nn.elu(jnp.dot(h1, params["w2"], precision=hp) + params["b2"])
    mean = jnp.mean(h2, axis=0, keepdims=True)
    var = jnp.mean((h2 - mean) ** 2, axis=0, keepdims=True)
    xn = (h2 - mean) / jnp.sqrt(var + BN_EPS)
    xn = xn * params["gamma"] + params["beta"]
    qk = jnp.dot(xn, params["wqk"], precision=hp) + params["bqk"]
    q = qk[:, :HD].reshape(B, N, HEAD, N_HEAD_DIM).transpose(0, 2, 1, 3)
    k = qk[:, HD:].reshape(B, N, HEAD, N_HEAD_DIM).transpose(0, 2, 1, 3)
    return jnp.einsum("bhnd,bhmd->bhnm", q, k, precision=hp)


# --------------------------- deterministic init --------------------------------
def init_params(key):
    def xavier(k, fan_in, fan_out):
        std = (2.0 / (fan_in + fan_out)) ** 0.5
        # stored as (fan_in, fan_out) so the kernel can do x @ W
        return jax.random.normal(k, (fan_in, fan_out), jnp.float32) * std

    k1, k2, k3, k4 = jax.random.split(key, 4)
    w1 = xavier(k1, N_IN, N_HID)
    w2 = xavier(k2, N_HID, N_HID)
    wq = xavier(k3, N_HID, HD)
    wk = xavier(k4, N_HID, HD)
    wqk = jnp.concatenate([wq, wk], axis=1)                    # (32, 64)

    b1 = jnp.full((N_HID,), 0.1, jnp.float32)
    b2 = jnp.full((N_HID,), 0.1, jnp.float32)
    gamma = jnp.ones((N_HID,), jnp.float32)
    beta = jnp.zeros((N_HID,), jnp.float32)
    bqk = jnp.full((2 * HD,), 0.1, jnp.float32)

    def pad_lanes(m):
        return jnp.pad(m, ((0, 0), (0, LANES - m.shape[1])))

    vec = jnp.zeros((8, LANES), jnp.float32)
    vec = vec.at[0, :N_HID].set(b1)
    vec = vec.at[1, :N_HID].set(b2)
    vec = vec.at[2, :N_HID].set(gamma)
    vec = vec.at[3, :N_HID].set(beta)
    vec = vec.at[4, :2 * HD].set(bqk)

    # Block-diagonal head mask: mask[h*N + j, h'*D + d] = (h == h').
    mask = jnp.asarray(np.kron(np.eye(HEAD, dtype=np.float32),
                               np.ones((N, N_HEAD_DIM), dtype=np.float32)))

    slab = jnp.concatenate([
        pad_lanes(w1),      # rows   0:16
        pad_lanes(w2),      # rows  16:48
        wqk,                # rows  48:80
        vec,                # rows  80:88
        pad_lanes(mask),    # rows  88:120
    ], axis=0)
    assert slab.shape == (SLAB_ROWS, LANES)

    return {
        "slab": slab,
        "w1": w1, "b1": b1, "w2": w2, "b2": b2,
        "gamma": gamma, "beta": beta, "wqk": wqk, "bqk": bqk,
    }


if __name__ == "__main__":
    key = jax.random.PRNGKey(0)
    k_in, k_par = jax.random.split(key)
    inputs = jax.random.normal(k_in, (B, N, N_IN), jnp.float32)
    params = init_params(k_par)

    probs = graph_learner_forward(inputs, params["slab"])
    jax.block_until_ready(probs)

    assert probs.shape == (B, HEAD, N, N)
    assert probs.dtype == jnp.float32
    assert bool(jnp.all(jnp.isfinite(probs)))

    ref = graph_learner_reference(inputs, params)
    assert bool(jnp.allclose(probs, ref, rtol=1e-3, atol=1e-3))

    print("KERNEL_OK")
</pallas_src>

<mosaic_0001>
module attributes {stable_mosaic.version = 11 : i64} {
  func.func @graph_learner_kernel(%arg0: memref<16x16xf32, #tpu.memory_space<vmem>>, %arg1: memref<120x64xf32, #tpu.memory_space<vmem>>, %arg2: memref<64x8xf32, #tpu.memory_space<vmem>>) attributes {dimension_semantics = [], scalar_prefetch = 0 : i64, scratch_operands = 0 : i64, tpu.core_type = #tpu.core_type<tc>} {
    %c0 = arith.constant 0 : index
    %c0_0 = arith.constant 0 : index
    %0 = vector.load %arg0[%c0, %c0_0] : memref<16x16xf32, #tpu.memory_space<vmem>>, vector<16x16xf32>
    %c0_1 = arith.constant 0 : index
    %c0_2 = arith.constant 0 : index
    %1 = vector.load %arg1[%c0_1, %c0_2] : memref<120x64xf32, #tpu.memory_space<vmem>>, vector<16x32xf32>
    %c16 = arith.constant 16 : index
    %c0_3 = arith.constant 0 : index
    %2 = vector.load %arg1[%c16, %c0_3] : memref<120x64xf32, #tpu.memory_space<vmem>>, vector<32x32xf32>
    %c48 = arith.constant 48 : index
    %c0_4 = arith.constant 0 : index
    %3 = vector.load %arg1[%c48, %c0_4] : memref<120x64xf32, #tpu.memory_space<vmem>>, vector<32x64xf32>
    %c80 = arith.constant 80 : index
    %c0_5 = arith.constant 0 : index
    %4 = vector.load %arg1[%c80, %c0_5] : memref<120x64xf32, #tpu.memory_space<vmem>>, vector<8x64xf32>
    %5 = vector.extract_strided_slice %4 {offsets = [0, 0], sizes = [1, 32], strides = [1, 1]} : vector<8x64xf32> to vector<1x32xf32>
    %6 = vector.extract_strided_slice %4 {offsets = [1, 0], sizes = [1, 32], strides = [1, 1]} : vector<8x64xf32> to vector<1x32xf32>
    %7 = vector.extract_strided_slice %4 {offsets = [2, 0], sizes = [1, 32], strides = [1, 1]} : vector<8x64xf32> to vector<1x32xf32>
    %8 = vector.extract_strided_slice %4 {offsets = [3, 0], sizes = [1, 32], strides = [1, 1]} : vector<8x64xf32> to vector<1x32xf32>
    %9 = vector.extract_strided_slice %4 {offsets = [4, 0], sizes = [1, 64], strides = [1, 1]} : vector<8x64xf32> to vector<1x64xf32>
    %c88 = arith.constant 88 : index
    %c0_6 = arith.constant 0 : index
    %10 = vector.load %arg1[%c88, %c0_6] : memref<120x64xf32, #tpu.memory_space<vmem>>, vector<32x32xf32>
    %cst = arith.constant dense<0.000000e+00> : vector<16x32xf32>
    %11 = tpu.matmul %0, %1, %cst {dimension_numbers = #tpu.dot_dimension_numbers<[1], [0], [0], [1], [0, 0, 1, 1], [], []>, precision = #tpu.contract_precision<fp32>} : vector<16x16xf32>, vector<16x32xf32>, vector<16x32xf32> -> vector<16x32xf32>
    %12 = vector.broadcast %5 : vector<1x32xf32> to vector<16x32xf32>
    %13 = arith.addf %11, %12 : vector<16x32xf32>
    %cst_7 = arith.constant 0.000000e+00 : f32
    %14 = vector.broadcast %cst_7 : f32 to vector<16x32xf32>
    %15 = arith.cmpf ogt, %13, %14 : vector<16x32xf32>
    %cst_8 = arith.constant 0.000000e+00 : f32
    %16 = vector.broadcast %cst_8 : f32 to vector<16x32xf32>
    %17 = arith.minimumf %13, %16 : vector<16x32xf32>
    %18 = math.exp %17 : vector<16x32xf32>
    %cst_9 = arith.constant 1.000000e+00 : f32
    %19 = vector.broadcast %cst_9 : f32 to vector<16x32xf32>
    %20 = arith.subf %18, %19 : vector<16x32xf32>
    %21 = arith.select %15, %13, %20 : vector<16x32xi1>, vector<16x32xf32>
    %cst_10 = arith.constant dense<0.000000e+00> : vector<16x32xf32>
    %22 = tpu.matmul %21, %2, %cst_10 {dimension_numbers = #tpu.dot_dimension_numbers<[1], [0], [0], [1], [0, 0, 1, 1], [], []>, precision = #tpu.contract_precision<fp32>} : vector<16x32xf32>, vector<32x32xf32>, vector<16x32xf32> -> vector<16x32xf32>
    %23 = vector.broadcast %6 : vector<1x32xf32> to vector<16x32xf32>
    %24 = arith.addf %22, %23 : vector<16x32xf32>
    %cst_11 = arith.constant 0.000000e+00 : f32
    %25 = vector.broadcast %cst_11 : f32 to vector<16x32xf32>
    %26 = arith.cmpf ogt, %24, %25 : vector<16x32xf32>
    %cst_12 = arith.constant 0.000000e+00 : f32
    %27 = vector.broadcast %cst_12 : f32 to vector<16x32xf32>
    %28 = arith.minimumf %24, %27 : vector<16x32xf32>
    %29 = math.exp %28 : vector<16x32xf32>
    %cst_13 = arith.constant 1.000000e+00 : f32
    %30 = vector.broadcast %cst_13 : f32 to vector<16x32xf32>
    %31 = arith.subf %29, %30 : vector<16x32xf32>
    %32 = arith.select %26, %24, %31 : vector<16x32xi1>, vector<16x32xf32>
    %cst_14 = arith.constant dense<0.000000e+00> : vector<32xf32>
    %33 = vector.multi_reduction <add>, %32, %cst_14 [0] : vector<16x32xf32> to vector<32xf32>
    %34 = vector.shape_cast %33 : vector<32xf32> to vector<1x32xf32>
    %cst_15 = arith.constant 1.600000e+01 : f32
    %35 = vector.broadcast %cst_15 : f32 to vector<1x32xf32>
    %36 = arith.divf %34, %35 : vector<1x32xf32>
    %37 = vector.broadcast %36 : vector<1x32xf32> to vector<16x32xf32>
    %38 = arith.subf %32, %37 : vector<16x32xf32>
    %39 = arith.mulf %38, %38 : vector<16x32xf32>
    %cst_16 = arith.constant dense<0.000000e+00> : vector<32xf32>
    %40 = vector.multi_reduction <add>, %39, %cst_16 [0] : vector<16x32xf32> to vector<32xf32>
    %41 = vector.shape_cast %40 : vector<32xf32> to vector<1x32xf32>
    %cst_17 = arith.constant 1.600000e+01 : f32
    %42 = vector.broadcast %cst_17 : f32 to vector<1x32xf32>
    %43 = arith.divf %41, %42 : vector<1x32xf32>
    %44 = vector.broadcast %36 : vector<1x32xf32> to vector<16x32xf32>
    %45 = arith.subf %32, %44 : vector<16x32xf32>
    %cst_18 = arith.constant 9.99999974E-6 : f32
    %46 = vector.broadcast %cst_18 : f32 to vector<1x32xf32>
    %47 = arith.addf %43, %46 : vector<1x32xf32>
    %48 = math.rsqrt %47 : vector<1x32xf32>
    %49 = vector.broadcast %48 : vector<1x32xf32> to vector<16x32xf32>
    %50 = arith.mulf %45, %49 : vector<16x32xf32>
    %51 = vector.broadcast %7 : vector<1x32xf32> to vector<16x32xf32>
    %52 = arith.mulf %50, %51 : vector<16x32xf32>
    %53 = vector.broadcast %8 : vector<1x32xf32> to vector<16x32xf32>
    %54 = arith.addf %52, %53 : vector<16x32xf32>
    %cst_19 = arith.constant dense<0.000000e+00> : vector<16x64xf32>
    %55 = tpu.matmul %54, %3, %cst_19 {dimension_numbers = #tpu.dot_dimension_numbers<[1], [0], [0], [1], [0, 0, 1, 1], [], []>, precision = #tpu.contract_precision<fp32>} : vector<16x32xf32>, vector<32x64xf32>, vector<16x64xf32> -> vector<16x64xf32>
    %56 = vector.broadcast %9 : vector<1x64xf32> to vector<16x64xf32>
    %57 = arith.addf %55, %56 : vector<16x64xf32>
    %58 = vector.extract_strided_slice %57 {offsets = [0, 0], sizes = [8, 32], strides = [1, 1]} : vector<16x64xf32> to vector<8x32xf32>
    %59 = vector.extract_strided_slice %57 {offsets = [0, 32], sizes = [8, 32], strides = [1, 1]} : vector<16x64xf32> to vector<8x32xf32>
    %60 = tpu.concatenate %59, %59, %59, %59 in 0 : vector<8x32xf32>, vector<8x32xf32>, vector<8x32xf32>, vector<8x32xf32> -> vector<32x32xf32>
    %61 = arith.mulf %60, %10 : vector<32x32xf32>
    %cst_20 = arith.constant dense<0.000000e+00> : vector<8x32xf32>
    %62 = tpu.matmul %58, %61, %cst_20 {dimension_numbers = #tpu.dot_dimension_numbers<[1], [1], [0], [0], [0, 0, 1, 0], [], []>, precision = #tpu.contract_precision<fp32>} : vector<8x32xf32>, vector<32x32xf32>, vector<8x32xf32> -> vector<8x32xf32>
    %63 = vector.extract_strided_slice %62 {offsets = [0, 0], sizes = [8, 8], strides = [1, 1]} : vector<8x32xf32> to vector<8x8xf32>
    %c0_21 = arith.constant 0 : index
    %c0_22 = arith.constant 0 : index
    %64 = vector.load %arg2[%c0_21, %c0_22] : memref<64x8xf32, #tpu.memory_space<vmem>>, vector<8x8xf32>
    tpu.vector_store %arg2[%c0_21, %c0_22], %63 {strides = array<i32>} : memref<64x8xf32, #tpu.memory_space<vmem>>, vector<8x8xf32>,
    %65 = vector.extract_strided_slice %62 {offsets = [0, 8], sizes = [8, 8], strides = [1, 1]} : vector<8x32xf32> to vector<8x8xf32>
    %c8 = arith.constant 8 : index
    %c0_23 = arith.constant 0 : index
    %66 = vector.load %arg2[%c8, %c0_23] : memref<64x8xf32, #tpu.memory_space<vmem>>, vector<8x8xf32>
    tpu.vector_store %arg2[%c8, %c0_23], %65 {strides = array<i32>} : memref<64x8xf32, #tpu.memory_space<vmem>>, vector<8x8xf32>,
    %67 = vector.extract_strided_slice %62 {offsets = [0, 16], sizes = [8, 8], strides = [1, 1]} : vector<8x32xf32> to vector<8x8xf32>
    %c16_24 = arith.constant 16 : index
    %c0_25 = arith.constant 0 : index
    %68 = vector.load %arg2[%c16_24, %c0_25] : memref<64x8xf32, #tpu.memory_space<vmem>>, vector<8x8xf32>
    tpu.vector_store %arg2[%c16_24, %c0_25], %67 {strides = array<i32>} : memref<64x8xf32, #tpu.memory_space<vmem>>, vector<8x8xf32>,
    %69 = vector.extract_strided_slice %62 {offsets = [0, 24], sizes = [8, 8], strides = [1, 1]} : vector<8x32xf32> to vector<8x8xf32>
    %c24 = arith.constant 24 : index
    %c0_26 = arith.constant 0 : index
    %70 = vector.load %arg2[%c24, %c0_26] : memref<64x8xf32, #tpu.memory_space<vmem>>, vector<8x8xf32>
    tpu.vector_store %arg2[%c24, %c0_26], %69 {strides = array<i32>} : memref<64x8xf32, #tpu.memory_space<vmem>>, vector<8x8xf32>,
    %71 = vector.extract_strided_slice %57 {offsets = [8, 0], sizes = [8, 32], strides = [1, 1]} : vector<16x64xf32> to vector<8x32xf32>
    %72 = vector.extract_strided_slice %57 {offsets = [8, 32], sizes = [8, 32], strides = [1, 1]} : vector<16x64xf32> to vector<8x32xf32>
    %73 = tpu.concatenate %72, %72, %72, %72 in 0 : vector<8x32xf32>, vector<8x32xf32>, vector<8x32xf32>, vector<8x32xf32> -> vector<32x32xf32>
    %74 = arith.mulf %73, %10 : vector<32x32xf32>
    %cst_27 = arith.constant dense<0.000000e+00> : vector<8x32xf32>
    %75 = tpu.matmul %71, %74, %cst_27 {dimension_numbers = #tpu.dot_dimension_numbers<[1], [1], [0], [0], [0, 0, 1, 0], [], []>, precision = #tpu.contract_precision<fp32>} : vector<8x32xf32>, vector<32x32xf32>, vector<8x32xf32> -> vector<8x32xf32>
    %76 = vector.extract_strided_slice %75 {offsets = [0, 0], sizes = [8, 8], strides = [1, 1]} : vector<8x32xf32> to vector<8x8xf32>
    %c32 = arith.constant 32 : index
    %c0_28 = arith.constant 0 : index
    %77 = vector.load %arg2[%c32, %c0_28] : memref<64x8xf32, #tpu.memory_space<vmem>>, vector<8x8xf32>
    tpu.vector_store %arg2[%c32, %c0_28], %76 {strides = array<i32>} : memref<64x8xf32, #tpu.memory_space<vmem>>, vector<8x8xf32>,
    %78 = vector.extract_strided_slice %75 {offsets = [0, 8], sizes = [8, 8], strides = [1, 1]} : vector<8x32xf32> to vector<8x8xf32>
    %c40 = arith.constant 40 : index
    %c0_29 = arith.constant 0 : index
    %79 = vector.load %arg2[%c40, %c0_29] : memref<64x8xf32, #tpu.memory_space<vmem>>, vector<8x8xf32>
    tpu.vector_store %arg2[%c40, %c0_29], %78 {strides = array<i32>} : memref<64x8xf32, #tpu.memory_space<vmem>>, vector<8x8xf32>,
    %80 = vector.extract_strided_slice %75 {offsets = [0, 16], sizes = [8, 8], strides = [1, 1]} : vector<8x32xf32> to vector<8x8xf32>
    %c48_30 = arith.constant 48 : index
    %c0_31 = arith.constant 0 : index
    %81 = vector.load %arg2[%c48_30, %c0_31] : memref<64x8xf32, #tpu.memory_space<vmem>>, vector<8x8xf32>
    tpu.vector_store %arg2[%c48_30, %c0_31], %80 {strides = array<i32>} : memref<64x8xf32, #tpu.memory_space<vmem>>, vector<8x8xf32>,
    %82 = vector.extract_strided_slice %75 {offsets = [0, 24], sizes = [8, 8], strides = [1, 1]} : vector<8x32xf32> to vector<8x8xf32>
    %c56 = arith.constant 56 : index
    %c0_32 = arith.constant 0 : index
    %83 = vector.load %arg2[%c56, %c0_32] : memref<64x8xf32, #tpu.memory_space<vmem>>, vector<8x8xf32>
    tpu.vector_store %arg2[%c56, %c0_32], %82 {strides = array<i32>} : memref<64x8xf32, #tpu.memory_space<vmem>>, vector<8x8xf32>,
    return
  }
}

</mosaic_0001>

<llo_original>
// kernel: _forward_impl.1
$region0: #{_forward_impl.1}
  #allocation0 [shape = 'u32[]', space=smem, size = 0x4, offset = 0x4, fixed_abs, tag = 'smem constant byte address 0x4 - core index']
  #allocation1 [shape = 'u32[72,128]{1,0:T(1,128)}', space=vmem, size = 0x9000, scoped, tag = 'internal scratch']
  %s0 = inlined_call_operand.vmem [shape: f32[16,16], index: 0, kind: input, shape index: {}]
  %s1 = inlined_call_operand.vmem [shape: f32[120,64], index: 1, kind: input, shape index: {}]
  %s2 = inlined_call_operand.hbm [shape: f32[64,8], index: 2, kind: output, shape index: {}]
  %s3 = sld [smem:[#allocation0]]
  $region18: #{_forward_impl.1} parent=0
    _
  %s5 = ssub.s32 1, %s3
  %s6 = scalar_select 0, %s5, %s3
  $region1: #{_forward_impl.1} parent=0
    #allocation2 [shape = 'u8[32768]{0}', space=vmem, size = 0x8000, scoped, tag = 'output window, operand 0, single buffered']
    #allocation3 [shape = 's32[1]{0}', space=sflag, size = 0x4, scoped, tag = 'scoped memory for _forward_impl.1']
    %7 = vsyncpa [#allocation3], 0
    // Predicated region
    $region2: #{_forward_impl.1} parent=1 // pred_check
      _
    $region3: #{_forward_impl.1} parent=1 // pred_check_branch
      %9 = sbr.rel (0) target = $region5
    $region4: #{_forward_impl.1} parent=1 // pred_region
      _
    $region5: #{_forward_impl.1} parent=1 // pred_fallthru
      _
    // Predicated region
    $region6: #{_forward_impl.1} parent=1 // pred_check
      _
    $region7: #{_forward_impl.1} parent=1 // pred_check_branch
      %11 = sbr.rel (0) target = $region9
    $region8: #{_forward_impl.1} parent=1 // pred_region
      _
    $region9: #{_forward_impl.1} parent=1 // pred_fallthru
      _
    %v12 = vld [vmem:[%s0] sm:$0xff]
    %v13 = vld [vmem:[%s0 + $0x8] sm:$0xff]
    %v14 = vld [vmem:[%s1] sm:$0xff]
    %v15 = vld [vmem:[%s1 + $0x8] sm:$0xff]
    %v16 = vld [vmem:[%s1 + $0x10] sm:$0xff]
    %v17 = vld [vmem:[%s1 + $0x18] sm:$0xff]
    %v18 = vld [vmem:[%s1 + $0x20] sm:$0xff]
    %v19 = vld [vmem:[%s1 + $0x28] sm:$0xff]
    %v20 = vld [vmem:[%s1 + $0x30] sm:$0xff]
    %v21 = vld [vmem:[%s1 + $0x38] sm:$0xff]
    %v22 = vld [vmem:[%s1 + $0x40] sm:$0xff]
    %v23 = vld [vmem:[%s1 + $0x48] sm:$0xff]
    %v24 = vld [vmem:[%s1 + $0x50] sm:$0xff]
    %v25 = vld [vmem:[%s1 + $0x58] sm:$0xff]
    %v26 = vld [vmem:[%s1 + $0x60] sm:$0xff]
    %v27 = vld [vmem:[%s1 + $0x68] sm:$0xff]
    %v28 = vld [vmem:[%s1 + $0x70] sm:$0xff]
    %v29 = vperm.slane %v24, 0
    %vm30 = vcmask 130048
    %v32 = vsel %vm30, %v12, 0
    %v35 = vsel %vm30, %v13, 0
    %37 = vmatpush.msra.mxu0 0.0
    %38 = vmatpush.msra.mxu0 0.0
    %39 = vmatpush.msra.mxu0 0.0
    %40 = vmatpush.msra.mxu0 0.0
    %41 = vmatpush.msra.mxu0 0.0
    %42 = vmatpush.msra.mxu0 0.0
    %43 = vmatpush.msra.mxu0 0.0
    %44 = vmatpush.msra.mxu0 0.0
    %45 = vmatpush.msra.mxu0 0.0
    %46 = vmatpush.msra.mxu0 0.0
    %47 = vmatpush.msra.mxu0 0.0
    %48 = vmatpush.msra.mxu0 0.0
    %49 = vmatpush.msra.mxu0 0.0
    %50 = vmatpush.msra.mxu0 0.0
    %v51 = vand.u32 %v15, 4294901760
    %52 = vmatpush.msra.mxu0 %v51
    %v53 = vand.u32 %v14, 4294901760
    %54 = vmatpush.msra.mxu0 %v53
    %v55 = vand.u32 %v32, 4294901760
    %v56 = vsub.f32 %v32, %v55
    %v57 = vand.u32 %v56, 4294901760
    %v58 = vsub.f32 %v56, %v57
    %v59 = vand.u32 %v58, 4294901760
    %60 = vmatmul.f32.gmra.mxu0 %v59
    %v61 = vpop.f32.mrf.mxu0
    %v62 = vadd.f32 %v29, %v61
    %v63 = vand.u32 %v35, 4294901760
    %v64 = vsub.f32 %v35, %v63
    %v65 = vand.u32 %v64, 4294901760
    %v66 = vsub.f32 %v64, %v65
    %v67 = vand.u32 %v66, 4294901760
    %68 = vmatmul.f32.gmra.mxu0 %v67
    %v69 = vpop.f32.mrf.mxu0
    %v70 = vadd.f32 %v29, %v69
    %71 = vdwg.mxu0
    %72 = vmatpush.msra.mxu0 0.0
    %73 = vmatpush.msra.mxu0 0.0
    %74 = vmatpush.msra.mxu0 0.0
    %75 = vmatpush.msra.mxu0 0.0
    %76 = vmatpush.msra.mxu0 0.0
    %77 = vmatpush.msra.mxu0 0.0
    %78 = vmatpush.msra.mxu0 0.0
    %79 = vmatpush.msra.mxu0 0.0
    %80 = vmatpush.msra.mxu0 0.0
    %81 = vmatpush.msra.mxu0 0.0
    %82 = vmatpush.msra.mxu0 0.0
    %83 = vmatpush.msra.mxu0 0.0
    %84 = vmatpush.msra.mxu0 0.0
    %85 = vmatpush.msra.mxu0 0.0
    %v86 = vand.u32 %v15, 4294901760
    %v87 = vsub.f32 %v15, %v86
    %v88 = vand.u32 %v87, 4294901760
    %v89 = vsub.f32 %v87, %v88
    %v90 = vand.u32 %v89, 4294901760
    %91 = vmatpush.msra.mxu0 %v90
    %v92 = vand.u32 %v14, 4294901760
    %v93 = vsub.f32 %v14, %v92
    %v94 = vand.u32 %v93, 4294901760
    %v95 = vsub.f32 %v93, %v94
    %v96 = vand.u32 %v95, 4294901760
    %97 = vmatpush.msra.mxu0 %v96
    %v98 = vand.u32 %v32, 4294901760
    %99 = vmatmul.f32.gmra.mxu0 %v98
    %v100 = vpop.f32.mrf.mxu0
    %v101 = vadd.f32 %v62, %v100
    %v102 = vand.u32 %v35, 4294901760
    %103 = vmatmul.f32.gmra.mxu0 %v102
    %v104 = vpop.f32.mrf.mxu0
    %v105 = vadd.f32 %v70, %v104
    %106 = vdwg.mxu0
    %107 = vmatpush.msra.mxu0 0.0
    %108 = vmatpush.msra.mxu0 0.0
    %109 = vmatpush.msra.mxu0 0.0
    %110 = vmatpush.msra.mxu0 0.0
    %111 = vmatpush.msra.mxu0 0.0
    %112 = vmatpush.msra.mxu0 0.0
    %113 = vmatpush.msra.mxu0 0.0
    %114 = vmatpush.msra.mxu0 0.0
    %115 = vmatpush.msra.mxu0 0.0
    %116 = vmatpush.msra.mxu0 0.0
    %117 = vmatpush.msra.mxu0 0.0
    %118 = vmatpush.msra.mxu0 0.0
    %119 = vmatpush.msra.mxu0 0.0
    %120 = vmatpush.msra.mxu0 0.0
    %v121 = vand.u32 %v15, 4294901760
    %v122 = vsub.f32 %v15, %v121
    %123 = vmatpush.msra.mxu0 %v122
    %v124 = vand.u32 %v14, 4294901760
    %v125 = vsub.f32 %v14, %v124
    %126 = vmatpush.msra.mxu0 %v125
    %v127 = vand.u32 %v32, 4294901760
    %v128 = vsub.f32 %v32, %v127
    %129 = vmatmul.f32.gmra.mxu0 %v128
    %v130 = vpop.f32.mrf.mxu0
    %v131 = vadd.f32 %v101, %v130
    %v132 = vand.u32 %v35, 4294901760
    %v133 = vsub.f32 %v35, %v132
    %134 = vmatmul.f32.gmra.mxu0 %v133
    %v135 = vpop.f32.mrf.mxu0
    %v136 = vadd.f32 %v105, %v135
    %137 = vdwg.mxu0
    %138 = vmatpush.msra.mxu0 0.0
    %139 = vmatpush.msra.mxu0 0.0
    %140 = vmatpush.msra.mxu0 0.0
    %141 = vmatpush.msra.mxu0 0.0
    %142 = vmatpush.msra.mxu0 0.0
    %143 = vmatpush.msra.mxu0 0.0
    %144 = vmatpush.msra.mxu0 0.0
    %145 = vmatpush.msra.mxu0 0.0
    %146 = vmatpush.msra.mxu0 0.0
    %147 = vmatpush.msra.mxu0 0.0
    %148 = vmatpush.msra.mxu0 0.0
    %149 = vmatpush.msra.mxu0 0.0
    %150 = vmatpush.msra.mxu0 0.0
    %151 = vmatpush.msra.mxu0 0.0
    %v152 = vand.u32 %v15, 4294901760
    %153 = vmatpush.msra.mxu0 %v152
    %v154 = vand.u32 %v14, 4294901760
    %155 = vmatpush.msra.mxu0 %v154
    %v156 = vand.u32 %v32, 4294901760
    %v157 = vsub.f32 %v32, %v156
    %v158 = vand.u32 %v157, 4294901760
    %159 = vmatmul.f32.gmra.mxu0 %v158
    %v160 = vpop.f32.mrf.mxu0
    %v161 = vadd.f32 %v131, %v160
    %v162 = vand.u32 %v35, 4294901760
    %v163 = vsub.f32 %v35, %v162
    %v164 = vand.u32 %v163, 4294901760
    %165 = vmatmul.f32.gmra.mxu0 %v164
    %v166 = vpop.f32.mrf.mxu0
    %v167 = vadd.f32 %v136, %v166
    %168 = vdwg.mxu0
    %169 = vmatpush.msra.mxu0 0.0
    %170 = vmatpush.msra.mxu0 0.0
    %171 = vmatpush.msra.mxu0 0.0
    %172 = vmatpush.msra.mxu0 0.0
    %173 = vmatpush.msra.mxu0 0.0
    %174 = vmatpush.msra.mxu0 0.0
    %175 = vmatpush.msra.mxu0 0.0
    %176 = vmatpush.msra.mxu0 0.0
    %177 = vmatpush.msra.mxu0 0.0
    %178 = vmatpush.msra.mxu0 0.0
    %179 = vmatpush.msra.mxu0 0.0
    %180 = vmatpush.msra.mxu0 0.0
    %181 = vmatpush.msra.mxu0 0.0
    %182 = vmatpush.msra.mxu0 0.0
    %v183 = vand.u32 %v15, 4294901760
    %v184 = vsub.f32 %v15, %v183
    %v185 = vand.u32 %v184, 4294901760
    %186 = vmatpush.msra.mxu0 %v185
    %v187 = vand.u32 %v14, 4294901760
    %v188 = vsub.f32 %v14, %v187
    %v189 = vand.u32 %v188, 4294901760
    %190 = vmatpush.msra.mxu0 %v189
    %v191 = vand.u32 %v32, 4294901760
    %192 = vmatmul.f32.gmra.mxu0 %v191
    %v193 = vpop.f32.mrf.mxu0
    %v194 = vadd.f32 %v161, %v193
    %v195 = vand.u32 %v35, 4294901760
    %196 = vmatmul.f32.gmra.mxu0 %v195
    %v197 = vpop.f32.mrf.mxu0
    %v198 = vadd.f32 %v167, %v197
    %199 = vdwg.mxu0
    %200 = vmatpush.msra.mxu0 0.0
    %201 = vmatpush.msra.mxu0 0.0
    %202 = vmatpush.msra.mxu0 0.0
    %203 = vmatpush.msra.mxu0 0.0
    %204 = vmatpush.msra.mxu0 0.0
    %205 = vmatpush.msra.mxu0 0.0
    %206 = vmatpush.msra.mxu0 0.0
    %207 = vmatpush.msra.mxu0 0.0
    %208 = vmatpush.msra.mxu0 0.0
    %209 = vmatpush.msra.mxu0 0.0
    %210 = vmatpush.msra.mxu0 0.0
    %211 = vmatpush.msra.mxu0 0.0
    %212 = vmatpush.msra.mxu0 0.0
    %213 = vmatpush.msra.mxu0 0.0
    %v214 = vand.u32 %v15, 4294901760
    %215 = vmatpush.msra.mxu0 %v214
    %v216 = vand.u32 %v14, 4294901760
    %217 = vmatpush.msra.mxu0 %v216
    %v218 = vand.u32 %v32, 4294901760
    %219 = vmatmul.f32.gmra.mxu0 %v218
    %v220 = vpop.f32.mrf.mxu0
    %v221 = vadd.f32 %v194, %v220
    %v222 = vand.u32 %v35, 4294901760
    %223 = vmatmul.f32.gmra.mxu0 %v222
    %v224 = vpop.f32.mrf.mxu0
    %v225 = vadd.f32 %v198, %v224
    %226 = vdwg.mxu0
    %vm227 = vcmp.gt.f32.partialorder %v221, 0.0
    %vm228 = vcmp.gt.f32.partialorder %v225, 0.0
    %v229 = vmin.f32 %v221, 0.0
    %v230 = vmin.f32 %v225, 0.0
    %v231 = vmul.f32 %v229, 1.442695
    %v232 = vpow.pop %v231
    %v233 = vmul.f32 %v230, 1.442695
    %v234 = vpow.pop %v233
    %v235 = vsub.f32 %v232, 1.0
    %v236 = vsub.f32 %v234, 1.0
    %v237 = vsel %vm227, %v221, %v235
    %v238 = vsel %vm228, %v225, %v236
    %v239 = vperm.slane %v24, 1
    %vm240 = vcmask 261120
    %v242 = vsel %vm240, %v237, 0
    %v245 = vsel %vm240, %v238, 0
    %247 = vmatpush.msra.mxu0 0.0
    %248 = vmatpush.msra.mxu0 0.0
    %249 = vmatpush.msra.mxu0 0.0
    %250 = vmatpush.msra.mxu0 0.0
    %251 = vmatpush.msra.mxu0 0.0
    %252 = vmatpush.msra.mxu0 0.0
    %253 = vmatpush.msra.mxu0 0.0
    %254 = vmatpush.msra.mxu0 0.0
    %255 = vmatpush.msra.mxu0 0.0
    %256 = vmatpush.msra.mxu0 0.0
    %257 = vmatpush.msra.mxu0 0.0
    %258 = vmatpush.msra.mxu0 0.0
    %v259 = vand.u32 %v19, 4294901760
    %260 = vmatpush.msra.mxu0 %v259
    %v261 = vand.u32 %v18, 4294901760
    %262 = vmatpush.msra.mxu0 %v261
    %v263 = vand.u32 %v17, 4294901760
    %264 = vmatpush.msra.mxu0 %v263
    %v265 = vand.u32 %v16, 4294901760
    %266 = vmatpush.msra.mxu0 %v265
    %v267 = vand.u32 %v242, 4294901760
    %v268 = vsub.f32 %v242, %v267
    %v269 = vand.u32 %v268, 4294901760
    %v270 = vsub.f32 %v268, %v269
    %v271 = vand.u32 %v270, 4294901760
    %272 = vmatmul.f32.gmra.mxu0 %v271
    %v273 = vpop.f32.mrf.mxu0
    %v274 = vadd.f32 %v239, %v273
    %v275 = vand.u32 %v245, 4294901760
    %v276 = vsub.f32 %v245, %v275
    %v277 = vand.u32 %v276, 4294901760
    %v278 = vsub.f32 %v276, %v277
    %v279 = vand.u32 %v278, 4294901760
    %280 = vmatmul.f32.gmra.mxu0 %v279
    %v281 = vpop.f32.mrf.mxu0
    %v282 = vadd.f32 %v239, %v281
    %283 = vdwg.mxu0
    %284 = vmatpush.msra.mxu0 0.0
    %285 = vmatpush.msra.mxu0 0.0
    %286 = vmatpush.msra.mxu0 0.0
    %287 = vmatpush.msra.mxu0 0.0
    %288 = vmatpush.msra.mxu0 0.0
    %289 = vmatpush.msra.mxu0 0.0
    %290 = vmatpush.msra.mxu0 0.0
    %291 = vmatpush.msra.mxu0 0.0
    %292 = vmatpush.msra.mxu0 0.0
    %293 = vmatpush.msra.mxu0 0.0
    %294 = vmatpush.msra.mxu0 0.0
    %295 = vmatpush.msra.mxu0 0.0
    %v296 = vand.u32 %v19, 4294901760
    %v297 = vsub.f32 %v19, %v296
    %v298 = vand.u32 %v297, 4294901760
    %v299 = vsub.f32 %v297, %v298
    %v300 = vand.u32 %v299, 4294901760
    %301 = vmatpush.msra.mxu0 %v300
    %v302 = vand.u32 %v18, 4294901760
    %v303 = vsub.f32 %v18, %v302
    %v304 = vand.u32 %v303, 4294901760
    %v305 = vsub.f32 %v303, %v304
    %v306 = vand.u32 %v305, 4294901760
    %307 = vmatpush.msra.mxu0 %v306
    %v308 = vand.u32 %v17, 4294901760
    %v309 = vsub.f32 %v17, %v308
    %v310 = vand.u32 %v309, 4294901760
    %v311 = vsub.f32 %v309, %v310
    %v312 = vand.u32 %v311, 4294901760
    %313 = vmatpush.msra.mxu0 %v312
    %v314 = vand.u32 %v16, 4294901760
    %v315 = vsub.f32 %v16, %v314
    %v316 = vand.u32 %v315, 4294901760
    %v317 = vsub.f32 %v315, %v316
    %v318 = vand.u32 %v317, 4294901760
    %319 = vmatpush.msra.mxu0 %v318
    %v320 = vand.u32 %v242, 4294901760
    %321 = vmatmul.f32.gmra.mxu0 %v320
    %v322 = vpop.f32.mrf.mxu0
    %v323 = vadd.f32 %v274, %v322
    %v324 = vand.u32 %v245, 4294901760
    %325 = vmatmul.f32.gmra.mxu0 %v324
    %v326 = vpop.f32.mrf.mxu0
    %v327 = vadd.f32 %v282, %v326
    %328 = vdwg.mxu0
    %329 = vmatpush.msra.mxu0 0.0
    %330 = vmatpush.msra.mxu0 0.0
    %331 = vmatpush.msra.mxu0 0.0
    %332 = vmatpush.msra.mxu0 0.0
    %333 = vmatpush.msra.mxu0 0.0
    %334 = vmatpush.msra.mxu0 0.0
    %335 = vmatpush.msra.mxu0 0.0
    %336 = vmatpush.msra.mxu0 0.0
    %337 = vmatpush.msra.mxu0 0.0
    %338 = vmatpush.msra.mxu0 0.0
    %339 = vmatpush.msra.mxu0 0.0
    %340 = vmatpush.msra.mxu0 0.0
    %v341 = vand.u32 %v19, 4294901760
    %v342 = vsub.f32 %v19, %v341
    %343 = vmatpush.msra.mxu0 %v342
    %v344 = vand.u32 %v18, 4294901760
    %v345 = vsub.f32 %v18, %v344
    %346 = vmatpush.msra.mxu0 %v345
    %v347 = vand.u32 %v17, 4294901760
    %v348 = vsub.f32 %v17, %v347
    %349 = vmatpush.msra.mxu0 %v348
    %v350 = vand.u32 %v16, 4294901760
    %v351 = vsub.f32 %v16, %v350
    %352 = vmatpush.msra.mxu0 %v351
    %v353 = vand.u32 %v242, 4294901760
    %v354 = vsub.f32 %v242, %v353
    %355 = vmatmul.f32.gmra.mxu0 %v354
    %v356 = vpop.f32.mrf.mxu0
    %v357 = vadd.f32 %v323, %v356
    %v358 = vand.u32 %v245, 4294901760
    %v359 = vsub.f32 %v245, %v358
    %360 = vmatmul.f32.gmra.mxu0 %v359
    %v361 = vpop.f32.mrf.mxu0
    %v362 = vadd.f32 %v327, %v361
    %363 = vdwg.mxu0
    %364 = vmatpush.msra.mxu0 0.0
    %365 = vmatpush.msra.mxu0 0.0
    %366 = vmatpush.msra.mxu0 0.0
    %367 = vmatpush.msra.mxu0 0.0
    %368 = vmatpush.msra.mxu0 0.0
    %369 = vmatpush.msra.mxu0 0.0
    %370 = vmatpush.msra.mxu0 0.0
    %371 = vmatpush.msra.mxu0 0.0
    %372 = vmatpush.msra.mxu0 0.0
    %373 = vmatpush.msra.mxu0 0.0
    %374 = vmatpush.msra.mxu0 0.0
    %375 = vmatpush.msra.mxu0 0.0
    %v376 = vand.u32 %v19, 4294901760
    %377 = vmatpush.msra.mxu0 %v376
    %v378 = vand.u32 %v18, 4294901760
    %379 = vmatpush.msra.mxu0 %v378
    %v380 = vand.u32 %v17, 4294901760
    %381 = vmatpush.msra.mxu0 %v380
    %v382 = vand.u32 %v16, 4294901760
    %383 = vmatpush.msra.mxu0 %v382
    %v384 = vand.u32 %v242, 4294901760
    %v385 = vsub.f32 %v242, %v384
    %v386 = vand.u32 %v385, 4294901760
    %387 = vmatmul.f32.gmra.mxu0 %v386
    %v388 = vpop.f32.mrf.mxu0
    %v389 = vadd.f32 %v357, %v388
    %v390 = vand.u32 %v245, 4294901760
    %v391 = vsub.f32 %v245, %v390
    %v392 = vand.u32 %v391, 4294901760
    %393 = vmatmul.f32.gmra.mxu0 %v392
    %v394 = vpop.f32.mrf.mxu0
    %v395 = vadd.f32 %v362, %v394
    %396 = vdwg.mxu0
    %397 = vmatpush.msra.mxu0 0.0
    %398 = vmatpush.msra.mxu0 0.0
    %399 = vmatpush.msra.mxu0 0.0
    %400 = vmatpush.msra.mxu0 0.0
    %401 = vmatpush.msra.mxu0 0.0
    %402 = vmatpush.msra.mxu0 0.0
    %403 = vmatpush.msra.mxu0 0.0
    %404 = vmatpush.msra.mxu0 0.0
    %405 = vmatpush.msra.mxu0 0.0
    %406 = vmatpush.msra.mxu0 0.0
    %407 = vmatpush.msra.mxu0 0.0
    %408 = vmatpush.msra.mxu0 0.0
    %v409 = vand.u32 %v19, 4294901760
    %v410 = vsub.f32 %v19, %v409
    %v411 = vand.u32 %v410, 4294901760
    %412 = vmatpush.msra.mxu0 %v411
    %v413 = vand.u32 %v18, 4294901760
    %v414 = vsub.f32 %v18, %v413
    %v415 = vand.u32 %v414, 4294901760
    %416 = vmatpush.msra.mxu0 %v415
    %v417 = vand.u32 %v17, 4294901760
    %v418 = vsub.f32 %v17, %v417
    %v419 = vand.u32 %v418, 4294901760
    %420 = vmatpush.msra.mxu0 %v419
    %v421 = vand.u32 %v16, 4294901760
    %v422 = vsub.f32 %v16, %v421
    %v423 = vand.u32 %v422, 4294901760
    %424 = vmatpush.msra.mxu0 %v423
    %v425 = vand.u32 %v242, 4294901760
    %426 = vmatmul.f32.gmra.mxu0 %v425
    %v427 = vpop.f32.mrf.mxu0
    %v428 = vadd.f32 %v389, %v427
    %v429 = vand.u32 %v245, 4294901760
    %430 = vmatmul.f32.gmra.mxu0 %v429
    %v431 = vpop.f32.mrf.mxu0
    %v432 = vadd.f32 %v395, %v431
    %433 = vdwg.mxu0
    %434 = vmatpush.msra.mxu0 0.0
    %435 = vmatpush.msra.mxu0 0.0
    %436 = vmatpush.msra.mxu0 0.0
    %437 = vmatpush.msra.mxu0 0.0
    %438 = vmatpush.msra.mxu0 0.0
    %439 = vmatpush.msra.mxu0 0.0
    %440 = vmatpush.msra.mxu0 0.0
    %441 = vmatpush.msra.mxu0 0.0
    %442 = vmatpush.msra.mxu0 0.0
    %443 = vmatpush.msra.mxu0 0.0
    %444 = vmatpush.msra.mxu0 0.0
    %445 = vmatpush.msra.mxu0 0.0
    %v446 = vand.u32 %v19, 4294901760
    %447 = vmatpush.msra.mxu0 %v446
    %v448 = vand.u32 %v18, 4294901760
    %449 = vmatpush.msra.mxu0 %v448
    %v450 = vand.u32 %v17, 4294901760
    %451 = vmatpush.msra.mxu0 %v450
    %v452 = vand.u32 %v16, 4294901760
    %453 = vmatpush.msra.mxu0 %v452
    %v454 = vand.u32 %v242, 4294901760
    %455 = vmatmul.f32.gmra.mxu0 %v454
    %v456 = vpop.f32.mrf.mxu0
    %v457 = vadd.f32 %v428, %v456
    %v458 = vand.u32 %v245, 4294901760
    %459 = vmatmul.f32.gmra.mxu0 %v458
    %v460 = vpop.f32.mrf.mxu0
    %v461 = vadd.f32 %v432, %v460
    %462 = vdwg.mxu0
    %vm463 = vcmp.gt.f32.partialorder %v457, 0.0
    %vm464 = vcmp.gt.f32.partialorder %v461, 0.0
    %v465 = vmin.f32 %v457, 0.0
    %v466 = vmin.f32 %v461, 0.0
    %v467 = vmul.f32 %v465, 1.442695
    %v468 = vpow.pop %v467
    %v469 = vmul.f32 %v466, 1.442695
    %v470 = vpow.pop %v469
    %v471 = vsub.f32 %v468, 1.0
    %v472 = vsub.f32 %v470, 1.0
    %v473 = vsel %vm463, %v457, %v471
    %v474 = vsel %vm464, %v461, %v472
    %v475 = vsel %vm240, %v473, 0.0
    %v476 = vsel %vm240, %v474, 0.0
    %v477 = vadd.f32 %v475, %v476
    %v478 = vrot.slane %v477, 4
    %v479 = vadd.f32 %v477, %v478
    %v480 = vrot.slane %v479, 2
    %v481 = vadd.f32 %v479, %v480
    %v482 = vrot.slane %v481, 1
    %v483 = vadd.f32 %v481, %v482
    %v484 = vrcp.pop 16.0
    %v485 = vmul.f32 16.0, %v484
    %v486 = vsub.f32 1.0, %v485
    %v487 = vmul.f32 %v484, %v486
    %v488 = vadd.f32 %v484, %v487
    %vm489 = vweird.f32 %v484
    %v490 = vsel %vm489, %v484, %v488
    %v491 = vmul.f32 %v483, %v490
    %v492 = vsub.f32 %v473, %v491
    %v493 = vsub.f32 %v474, %v491
    %v494 = vmul.f32 %v492, %v492
    %v495 = vmul.f32 %v493, %v493
    %v496 = vsel %vm240, %v494, 0.0
    %v497 = vsel %vm240, %v495, 0.0
    %v498 = vadd.f32 %v496, %v497
    %v499 = vrot.slane %v498, 4
    %v500 = vadd.f32 %v498, %v499
    %v501 = vrot.slane %v500, 2
    %v502 = vadd.f32 %v500, %v501
    %v503 = vrot.slane %v502, 1
    %v504 = vadd.f32 %v502, %v503
    %v505 = vmul.f32 %v504, %v490
    %v506 = vadd.f32 %v505, 1e-05
    %v507 = vrsqrt.pop %v506
    %v508 = vmul.f32 %v507, %v506
    %v509 = vmul.f32 %v508, %v507
    %v510 = vmul.f32 0.5, %v509
    %v511 = vsub.f32 1.5, %v510
    %v512 = vmul.f32 %v507, %v511
    %vm513 = vweird.f32 %v506
    %vm514 = vweird.f32 %v507
    %vm515 = vmor %vm513, %vm514
    %v516 = vsel %vm515, %v507, %v512
    %v517 = vmul.f32 %v492, %v516
    %v518 = vmul.f32 %v493, %v516
    %v519 = vperm.slane %v24, 2
    %v520 = vmul.f32 %v517, %v519
    %v521 = vmul.f32 %v518, %v519
    %v522 = vperm.slane %v24, 3
    %v523 = vadd.f32 %v520, %v522
    %v524 = vadd.f32 %v521, %v522
    %v525 = vperm.slane %v24, 4
    %v527 = vsel %vm240, %v523, 0
    %v530 = vsel %vm240, %v524, 0
    %532 = vmatpush.msra.mxu0 0.0
    %533 = vmatpush.msra.mxu0 0.0
    %534 = vmatpush.msra.mxu0 0.0
    %535 = vmatpush.msra.mxu0 0.0
    %536 = vmatpush.msra.mxu0 0.0
    %537 = vmatpush.msra.mxu0 0.0
    %538 = vmatpush.msra.mxu0 0.0
    %539 = vmatpush.msra.mxu0 0.0
    %540 = vmatpush.msra.mxu0 0.0
    %541 = vmatpush.msra.mxu0 0.0
    %542 = vmatpush.msra.mxu0 0.0
    %543 = vmatpush.msra.mxu0 0.0
    %v544 = vand.u32 %v23, 4294901760
    %545 = vmatpush.msra.mxu0 %v544
    %v546 = vand.u32 %v22, 4294901760
    %547 = vmatpush.msra.mxu0 %v546
    %v548 = vand.u32 %v21, 4294901760
    %549 = vmatpush.msra.mxu0 %v548
    %v550 = vand.u32 %v20, 4294901760
    %551 = vmatpush.msra.mxu0 %v550
    %v552 = vand.u32 %v527, 4294901760
    %v553 = vsub.f32 %v527, %v552
    %v554 = vand.u32 %v553, 4294901760
    %v555 = vsub.f32 %v553, %v554
    %v556 = vand.u32 %v555, 4294901760
    %557 = vmatmul.f32.gmra.mxu0 %v556
    %v558 = vpop.f32.mrf.mxu0
    %v559 = vadd.f32 %v525, %v558
    %v560 = vand.u32 %v530, 4294901760
    %v561 = vsub.f32 %v530, %v560
    %v562 = vand.u32 %v561, 4294901760
    %v563 = vsub.f32 %v561, %v562
    %v564 = vand.u32 %v563, 4294901760
    %565 = vmatmul.f32.gmra.mxu0 %v564
    %v566 = vpop.f32.mrf.mxu0
    %v567 = vadd.f32 %v525, %v566
    %568 = vdwg.mxu0
    %569 = vmatpush.msra.mxu0 0.0
    %570 = vmatpush.msra.mxu0 0.0
    %571 = vmatpush.msra.mxu0 0.0
    %572 = vmatpush.msra.mxu0 0.0
    %573 = vmatpush.msra.mxu0 0.0
    %574 = vmatpush.msra.mxu0 0.0
    %575 = vmatpush.msra.mxu0 0.0
    %576 = vmatpush.msra.mxu0 0.0
    %577 = vmatpush.msra.mxu0 0.0
    %578 = vmatpush.msra.mxu0 0.0
    %579 = vmatpush.msra.mxu0 0.0
    %580 = vmatpush.msra.mxu0 0.0
    %v581 = vand.u32 %v23, 4294901760
    %v582 = vsub.f32 %v23, %v581
    %v583 = vand.u32 %v582, 4294901760
    %v584 = vsub.f32 %v582, %v583
    %v585 = vand.u32 %v584, 4294901760
    %586 = vmatpush.msra.mxu0 %v585
    %v587 = vand.u32 %v22, 4294901760
    %v588 = vsub.f32 %v22, %v587
    %v589 = vand.u32 %v588, 4294901760
    %v590 = vsub.f32 %v588, %v589
    %v591 = vand.u32 %v590, 4294901760
    %592 = vmatpush.msra.mxu0 %v591
    %v593 = vand.u32 %v21, 4294901760
    %v594 = vsub.f32 %v21, %v593
    %v595 = vand.u32 %v594, 4294901760
    %v596 = vsub.f32 %v594, %v595
    %v597 = vand.u32 %v596, 4294901760
    %598 = vmatpush.msra.mxu0 %v597
    %v599 = vand.u32 %v20, 4294901760
    %v600 = vsub.f32 %v20, %v599
    %v601 = vand.u32 %v600, 4294901760
    %v602 = vsub.f32 %v600, %v601
    %v603 = vand.u32 %v602, 4294901760
    %604 = vmatpush.msra.mxu0 %v603
    %v605 = vand.u32 %v527, 4294901760
    %606 = vmatmul.f32.gmra.mxu0 %v605
    %v607 = vpop.f32.mrf.mxu0
    %v608 = vadd.f32 %v559, %v607
    %v609 = vand.u32 %v530, 4294901760
    %610 = vmatmul.f32.gmra.mxu0 %v609
    %v611 = vpop.f32.mrf.mxu0
    %v612 = vadd.f32 %v567, %v611
    %613 = vdwg.mxu0
    %614 = vmatpush.msra.mxu0 0.0
    %615 = vmatpush.msra.mxu0 0.0
    %616 = vmatpush.msra.mxu0 0.0
    %617 = vmatpush.msra.mxu0 0.0
    %618 = vmatpush.msra.mxu0 0.0
    %619 = vmatpush.msra.mxu0 0.0
    %620 = vmatpush.msra.mxu0 0.0
    %621 = vmatpush.msra.mxu0 0.0
    %622 = vmatpush.msra.mxu0 0.0
    %623 = vmatpush.msra.mxu0 0.0
    %624 = vmatpush.msra.mxu0 0.0
    %625 = vmatpush.msra.mxu0 0.0
    %v626 = vand.u32 %v23, 4294901760
    %v627 = vsub.f32 %v23, %v626
    %628 = vmatpush.msra.mxu0 %v627
    %v629 = vand.u32 %v22, 4294901760
    %v630 = vsub.f32 %v22, %v629
    %631 = vmatpush.msra.mxu0 %v630
    %v632 = vand.u32 %v21, 4294901760
    %v633 = vsub.f32 %v21, %v632
    %634 = vmatpush.msra.mxu0 %v633
    %v635 = vand.u32 %v20, 4294901760
    %v636 = vsub.f32 %v20, %v635
    %637 = vmatpush.msra.mxu0 %v636
    %v638 = vand.u32 %v527, 4294901760
    %v639 = vsub.f32 %v527, %v638
    %640 = vmatmul.f32.gmra.mxu0 %v639
    %v641 = vpop.f32.mrf.mxu0
    %v642 = vadd.f32 %v608, %v641
    %v643 = vand.u32 %v530, 4294901760
    %v644 = vsub.f32 %v530, %v643
    %645 = vmatmul.f32.gmra.mxu0 %v644
    %v646 = vpop.f32.mrf.mxu0
    %v647 = vadd.f32 %v612, %v646
    %648 = vdwg.mxu0
    %649 = vmatpush.msra.mxu0 0.0
    %650 = vmatpush.msra.mxu0 0.0
    %651 = vmatpush.msra.mxu0 0.0
    %652 = vmatpush.msra.mxu0 0.0
    %653 = vmatpush.msra.mxu0 0.0
    %654 = vmatpush.msra.mxu0 0.0
    %655 = vmatpush.msra.mxu0 0.0
    %656 = vmatpush.msra.mxu0 0.0
    %657 = vmatpush.msra.mxu0 0.0
    %658 = vmatpush.msra.mxu0 0.0
    %659 = vmatpush.msra.mxu0 0.0
    %660 = vmatpush.msra.mxu0 0.0
    %v661 = vand.u32 %v23, 4294901760
    %662 = vmatpush.msra.mxu0 %v661
    %v663 = vand.u32 %v22, 4294901760
    %664 = vmatpush.msra.mxu0 %v663
    %v665 = vand.u32 %v21, 4294901760
    %666 = vmatpush.msra.mxu0 %v665
    %v667 = vand.u32 %v20, 4294901760
    %668 = vmatpush.msra.mxu0 %v667
    %v669 = vand.u32 %v527, 4294901760
    %v670 = vsub.f32 %v527, %v669
    %v671 = vand.u32 %v670, 4294901760
    %672 = vmatmul.f32.gmra.mxu0 %v671
    %v673 = vpop.f32.mrf.mxu0
    %v674 = vadd.f32 %v642, %v673
    %v675 = vand.u32 %v530, 4294901760
    %v676 = vsub.f32 %v530, %v675
    %v677 = vand.u32 %v676, 4294901760
    %678 = vmatmul.f32.gmra.mxu0 %v677
    %v679 = vpop.f32.mrf.mxu0
    %v680 = vadd.f32 %v647, %v679
    %681 = vdwg.mxu0
    %682 = vmatpush.msra.mxu0 0.0
    %683 = vmatpush.msra.mxu0 0.0
    %684 = vmatpush.msra.mxu0 0.0
    %685 = vmatpush.msra.mxu0 0.0
    %686 = vmatpush.msra.mxu0 0.0
    %687 = vmatpush.msra.mxu0 0.0
    %688 = vmatpush.msra.mxu0 0.0
    %689 = vmatpush.msra.mxu0 0.0
    %690 = vmatpush.msra.mxu0 0.0
    %691 = vmatpush.msra.mxu0 0.0
    %692 = vmatpush.msra.mxu0 0.0
    %693 = vmatpush.msra.mxu0 0.0
    %v694 = vand.u32 %v23, 4294901760
    %v695 = vsub.f32 %v23, %v694
    %v696 = vand.u32 %v695, 4294901760
    %697 = vmatpush.msra.mxu0 %v696
    %v698 = vand.u32 %v22, 4294901760
    %v699 = vsub.f32 %v22, %v698
    %v700 = vand.u32 %v699, 4294901760
    %701 = vmatpush.msra.mxu0 %v700
    %v702 = vand.u32 %v21, 4294901760
    %v703 = vsub.f32 %v21, %v702
    %v704 = vand.u32 %v703, 4294901760
    %705 = vmatpush.msra.mxu0 %v704
    %v706 = vand.u32 %v20, 4294901760
    %v707 = vsub.f32 %v20, %v706
    %v708 = vand.u32 %v707, 4294901760
    %709 = vmatpush.msra.mxu0 %v708
    %v710 = vand.u32 %v527, 4294901760
    %711 = vmatmul.f32.gmra.mxu0 %v710
    %v712 = vpop.f32.mrf.mxu0
    %v713 = vadd.f32 %v674, %v712
    %v714 = vand.u32 %v530, 4294901760
    %715 = vmatmul.f32.gmra.mxu0 %v714
    %v716 = vpop.f32.mrf.mxu0
    %v717 = vadd.f32 %v680, %v716
    %718 = vdwg.mxu0
    %719 = vmatpush.msra.mxu0 0.0
    %720 = vmatpush.msra.mxu0 0.0
    %721 = vmatpush.msra.mxu0 0.0
    %722 = vmatpush.msra.mxu0 0.0
    %723 = vmatpush.msra.mxu0 0.0
    %724 = vmatpush.msra.mxu0 0.0
    %725 = vmatpush.msra.mxu0 0.0
    %726 = vmatpush.msra.mxu0 0.0
    %727 = vmatpush.msra.mxu0 0.0
    %728 = vmatpush.msra.mxu0 0.0
    %729 = vmatpush.msra.mxu0 0.0
    %730 = vmatpush.msra.mxu0 0.0
    %v731 = vand.u32 %v23, 4294901760
    %732 = vmatpush.msra.mxu0 %v731
    %v733 = vand.u32 %v22, 4294901760
    %734 = vmatpush.msra.mxu0 %v733
    %v735 = vand.u32 %v21, 4294901760
    %736 = vmatpush.msra.mxu0 %v735
    %v737 = vand.u32 %v20, 4294901760
    %738 = vmatpush.msra.mxu0 %v737
    %v739 = vand.u32 %v527, 4294901760
    %740 = vmatmul.f32.gmra.mxu0 %v739
    %v741 = vpop.f32.mrf.mxu0
    %v742 = vadd.f32 %v713, %v741
    %v743 = vand.u32 %v530, 4294901760
    %744 = vmatmul.f32.gmra.mxu0 %v743
    %v745 = vpop.f32.mrf.mxu0
    %v746 = vadd.f32 %v717, %v745
    %747 = vdwg.mxu0
    %752 = vrot.lane.b32.xlu0 %v25, 32
    %v753 = vpop.permute.xlu0 %752
    %754 = vrot.lane.b32.xlu0 %v26, 32
    %v755 = vpop.permute.xlu0 %754
    %756 = vrot.lane.b32.xlu0 %v27, 32
    %v757 = vpop.permute.xlu0 %756
    %758 = vrot.lane.b32.xlu0 %v28, 32
    %v759 = vpop.permute.xlu0 %758
    %v764 = vmul.f32 %v742, %v753
    %v765 = vmul.f32 %v742, %v755
    %v766 = vmul.f32 %v742, %v757
    %v767 = vmul.f32 %v742, %v759
    %772 = vrot.lane.b32.xlu0 %v764, 96
    %v773 = vpop.permute.xlu0 %772
    %774 = vrot.lane.b32.xlu0 %v765, 96
    %v775 = vpop.permute.xlu0 %774
    %776 = vrot.lane.b32.xlu0 %v766, 96
    %v777 = vpop.permute.xlu0 %776
    %778 = vrot.lane.b32.xlu0 %v767, 96
    %v779 = vpop.permute.xlu0 %778
    %v781 = vsel %vm240, %v742, 0
    %v783 = vsel %vm240, %v773, 0
    %v785 = vsel %vm240, %v775, 0
    %v787 = vsel %vm240, %v777, 0
    %v789 = vsel %vm240, %v779, 0
    %791 = vmatpush.xpose.msra.mxu0 0.0
    %792 = vmatpush.xpose.msra.mxu0 0.0
    %793 = vmatpush.xpose.msra.mxu0 0.0
    %794 = vmatpush.xpose.msra.mxu0 0.0
    %795 = vmatpush.xpose.msra.mxu0 0.0
    %796 = vmatpush.xpose.msra.mxu0 0.0
    %797 = vmatpush.xpose.msra.mxu0 0.0
    %798 = vmatpush.xpose.msra.mxu0 0.0
    %799 = vmatpush.xpose.msra.mxu0 0.0
    %800 = vmatpush.xpose.msra.mxu0 0.0
    %801 = vmatpush.xpose.msra.mxu0 0.0
    %802 = vmatpush.xpose.msra.mxu0 0.0
    %v803 = vand.u32 %v789, 4294901760
    %804 = vmatpush.xpose.msra.mxu0 %v803
    %v805 = vand.u32 %v787, 4294901760
    %806 = vmatpush.xpose.msra.mxu0 %v805
    %v807 = vand.u32 %v785, 4294901760
    %808 = vmatpush.xpose.msra.mxu0 %v807
    %v809 = vand.u32 %v783, 4294901760
    %810 = vmatpush.xpose.msra.mxu0 %v809
    %v811 = vand.u32 %v781, 4294901760
    %v812 = vsub.f32 %v781, %v811
    %v813 = vand.u32 %v812, 4294901760
    %v814 = vsub.f32 %v812, %v813
    %v815 = vand.u32 %v814, 4294901760
    %816 = vmatmul.f32.gmra.mxu0 %v815
    %v817 = vpop.f32.mrf.mxu0
    %v818 = vadd.f32 0.0, %v817
    %819 = vdwg.mxu0
    %820 = vmatpush.xpose.msra.mxu0 0.0
    %821 = vmatpush.xpose.msra.mxu0 0.0
    %822 = vmatpush.xpose.msra.mxu0 0.0
    %823 = vmatpush.xpose.msra.mxu0 0.0
    %824 = vmatpush.xpose.msra.mxu0 0.0
    %825 = vmatpush.xpose.msra.mxu0 0.0
    %826 = vmatpush.xpose.msra.mxu0 0.0
    %827 = vmatpush.xpose.msra.mxu0 0.0
    %828 = vmatpush.xpose.msra.mxu0 0.0
    %829 = vmatpush.xpose.msra.mxu0 0.0
    %830 = vmatpush.xpose.msra.mxu0 0.0
    %831 = vmatpush.xpose.msra.mxu0 0.0
    %v832 = vand.u32 %v789, 4294901760
    %v833 = vsub.f32 %v789, %v832
    %v834 = vand.u32 %v833, 4294901760
    %v835 = vsub.f32 %v833, %v834
    %v836 = vand.u32 %v835, 4294901760
    %837 = vmatpush.xpose.msra.mxu0 %v836
    %v838 = vand.u32 %v787, 4294901760
    %v839 = vsub.f32 %v787, %v838
    %v840 = vand.u32 %v839, 4294901760
    %v841 = vsub.f32 %v839, %v840
    %v842 = vand.u32 %v841, 4294901760
    %843 = vmatpush.xpose.msra.mxu0 %v842
    %v844 = vand.u32 %v785, 4294901760
    %v845 = vsub.f32 %v785, %v844
    %v846 = vand.u32 %v845, 4294901760
    %v847 = vsub.f32 %v845, %v846
    %v848 = vand.u32 %v847, 4294901760
    %849 = vmatpush.xpose.msra.mxu0 %v848
    %v850 = vand.u32 %v783, 4294901760
    %v851 = vsub.f32 %v783, %v850
    %v852 = vand.u32 %v851, 4294901760
    %v853 = vsub.f32 %v851, %v852
    %v854 = vand.u32 %v853, 4294901760
    %855 = vmatpush.xpose.msra.mxu0 %v854
    %v856 = vand.u32 %v781, 4294901760
    %857 = vmatmul.f32.gmra.mxu0 %v856
    %v858 = vpop.f32.mrf.mxu0
    %v859 = vadd.f32 %v818, %v858
    %860 = vdwg.mxu0
    %861 = vmatpush.xpose.msra.mxu0 0.0
    %862 = vmatpush.xpose.msra.mxu0 0.0
    %863 = vmatpush.xpose.msra.mxu0 0.0
    %864 = vmatpush.xpose.msra.mxu0 0.0
    %865 = vmatpush.xpose.msra.mxu0 0.0
    %866 = vmatpush.xpose.msra.mxu0 0.0
    %867 = vmatpush.xpose.msra.mxu0 0.0
    %868 = vmatpush.xpose.msra.mxu0 0.0
    %869 = vmatpush.xpose.msra.mxu0 0.0
    %870 = vmatpush.xpose.msra.mxu0 0.0
    %871 = vmatpush.xpose.msra.mxu0 0.0
    %872 = vmatpush.xpose.msra.mxu0 0.0
    %v873 = vand.u32 %v789, 4294901760
    %v874 = vsub.f32 %v789, %v873
    %875 = vmatpush.xpose.msra.mxu0 %v874
    %v876 = vand.u32 %v787, 4294901760
    %v877 = vsub.f32 %v787, %v876
    %878 = vmatpush.xpose.msra.mxu0 %v877
    %v879 = vand.u32 %v785, 4294901760
    %v880 = vsub.f32 %v785, %v879
    %881 = vmatpush.xpose.msra.mxu0 %v880
    %v882 = vand.u32 %v783, 4294901760
    %v883 = vsub.f32 %v783, %v882
    %884 = vmatpush.xpose.msra.mxu0 %v883
    %v885 = vand.u32 %v781, 4294901760
    %v886 = vsub.f32 %v781, %v885
    %887 = vmatmul.f32.gmra.mxu0 %v886
    %v888 = vpop.f32.mrf.mxu0
    %v889 = vadd.f32 %v859, %v888
    %890 = vdwg.mxu0
    %891 = vmatpush.xpose.msra.mxu0 0.0
    %892 = vmatpush.xpose.msra.mxu0 0.0
    %893 = vmatpush.xpose.msra.mxu0 0.0
    %894 = vmatpush.xpose.msra.mxu0 0.0
    %895 = vmatpush.xpose.msra.mxu0 0.0
    %896 = vmatpush.xpose.msra.mxu0 0.0
    %897 = vmatpush.xpose.msra.mxu0 0.0
    %898 = vmatpush.xpose.msra.mxu0 0.0
    %899 = vmatpush.xpose.msra.mxu0 0.0
    %900 = vmatpush.xpose.msra.mxu0 0.0
    %901 = vmatpush.xpose.msra.mxu0 0.0
    %902 = vmatpush.xpose.msra.mxu0 0.0
    %v903 = vand.u32 %v789, 4294901760
    %904 = vmatpush.xpose.msra.mxu0 %v903
    %v905 = vand.u32 %v787, 4294901760
    %906 = vmatpush.xpose.msra.mxu0 %v905
    %v907 = vand.u32 %v785, 4294901760
    %908 = vmatpush.xpose.msra.mxu0 %v907
    %v909 = vand.u32 %v783, 4294901760
    %910 = vmatpush.xpose.msra.mxu0 %v909
    %v911 = vand.u32 %v781, 4294901760
    %v912 = vsub.f32 %v781, %v911
    %v913 = vand.u32 %v912, 4294901760
    %914 = vmatmul.f32.gmra.mxu0 %v913
    %v915 = vpop.f32.mrf.mxu0
    %v916 = vadd.f32 %v889, %v915
    %917 = vdwg.mxu0
    %918 = vmatpush.xpose.msra.mxu0 0.0
    %919 = vmatpush.xpose.msra.mxu0 0.0
    %920 = vmatpush.xpose.msra.mxu0 0.0
    %921 = vmatpush.xpose.msra.mxu0 0.0
    %922 = vmatpush.xpose.msra.mxu0 0.0
    %923 = vmatpush.xpose.msra.mxu0 0.0
    %924 = vmatpush.xpose.msra.mxu0 0.0
    %925 = vmatpush.xpose.msra.mxu0 0.0
    %926 = vmatpush.xpose.msra.mxu0 0.0
    %927 = vmatpush.xpose.msra.mxu0 0.0
    %928 = vmatpush.xpose.msra.mxu0 0.0
    %929 = vmatpush.xpose.msra.mxu0 0.0
    %v930 = vand.u32 %v789, 4294901760
    %v931 = vsub.f32 %v789, %v930
    %v932 = vand.u32 %v931, 4294901760
    %933 = vmatpush.xpose.msra.mxu0 %v932
    %v934 = vand.u32 %v787, 4294901760
    %v935 = vsub.f32 %v787, %v934
    %v936 = vand.u32 %v935, 4294901760
    %937 = vmatpush.xpose.msra.mxu0 %v936
    %v938 = vand.u32 %v785, 4294901760
    %v939 = vsub.f32 %v785, %v938
    %v940 = vand.u32 %v939, 4294901760
    %941 = vmatpush.xpose.msra.mxu0 %v940
    %v942 = vand.u32 %v783, 4294901760
    %v943 = vsub.f32 %v783, %v942
    %v944 = vand.u32 %v943, 4294901760
    %945 = vmatpush.xpose.msra.mxu0 %v944
    %v946 = vand.u32 %v781, 4294901760
    %947 = vmatmul.f32.gmra.mxu0 %v946
    %v948 = vpop.f32.mrf.mxu0
    %v949 = vadd.f32 %v916, %v948
    %950 = vdwg.mxu0
    %951 = vmatpush.xpose.msra.mxu0 0.0
    %952 = vmatpush.xpose.msra.mxu0 0.0
    %953 = vmatpush.xpose.msra.mxu0 0.0
    %954 = vmatpush.xpose.msra.mxu0 0.0
    %955 = vmatpush.xpose.msra.mxu0 0.0
    %956 = vmatpush.xpose.msra.mxu0 0.0
    %957 = vmatpush.xpose.msra.mxu0 0.0
    %958 = vmatpush.xpose.msra.mxu0 0.0
    %959 = vmatpush.xpose.msra.mxu0 0.0
    %960 = vmatpush.xpose.msra.mxu0 0.0
    %961 = vmatpush.xpose.msra.mxu0 0.0
    %962 = vmatpush.xpose.msra.mxu0 0.0
    %v963 = vand.u32 %v789, 4294901760
    %964 = vmatpush.xpose.msra.mxu0 %v963
    %v965 = vand.u32 %v787, 4294901760
    %966 = vmatpush.xpose.msra.mxu0 %v965
    %v967 = vand.u32 %v785, 4294901760
    %968 = vmatpush.xpose.msra.mxu0 %v967
    %v969 = vand.u32 %v783, 4294901760
    %970 = vmatpush.xpose.msra.mxu0 %v969
    %v971 = vand.u32 %v781, 4294901760
    %972 = vmatmul.f32.gmra.mxu0 %v971
    %v973 = vpop.f32.mrf.mxu0
    %v974 = vadd.f32 %v949, %v973
    %975 = vdwg.mxu0
    %vm976 = vcmask 64512
    %977 = vst.msk [vmem:[#allocation2] sm:$0xff] %vm976, %v974
    %979 = vrot.lane.b32.xlu0 %v974, 120
    %v980 = vpop.permute.xlu0 %979
    %982 = vst.msk [vmem:[#allocation2 + $0x8] sm:$0xff] %vm976, %v980
    %983 = vrot.lane.b32.xlu0 %v974, 112
    %v984 = vpop.permute.xlu0 %983
    %986 = vst.msk [vmem:[#allocation2 + $0x10] sm:$0xff] %vm976, %v984
    %987 = vrot.lane.b32.xlu0 %v974, 104
    %v988 = vpop.permute.xlu0 %987
    %990 = vst.msk [vmem:[#allocation2 + $0x18] sm:$0xff] %vm976, %v988
    %v991 = vmul.f32 %v746, %v753
    %v992 = vmul.f32 %v746, %v755
    %v993 = vmul.f32 %v746, %v757
    %v994 = vmul.f32 %v746, %v759
    %999 = vrot.lane.b32.xlu0 %v991, 96
    %v1000 = vpop.permute.xlu0 %999
    %1001 = vrot.lane.b32.xlu0 %v992, 96
    %v1002 = vpop.permute.xlu0 %1001
    %1003 = vrot.lane.b32.xlu0 %v993, 96
    %v1004 = vpop.permute.xlu0 %1003
    %1005 = vrot.lane.b32.xlu0 %v994, 96
    %v1006 = vpop.permute.xlu0 %1005
    %v1008 = vsel %vm240, %v746, 0
    %v1010 = vsel %vm240, %v1000, 0
    %v1012 = vsel %vm240, %v1002, 0
    %v1014 = vsel %vm240, %v1004, 0
    %v1016 = vsel %vm240, %v1006, 0
    %1018 = vmatpush.xpose.msra.mxu0 0.0
    %1019 = vmatpush.xpose.msra.mxu0 0.0
    %1020 = vmatpush.xpose.msra.mxu0 0.0
    %1021 = vmatpush.xpose.msra.mxu0 0.0
    %1022 = vmatpush.xpose.msra.mxu0 0.0
    %1023 = vmatpush.xpose.msra.mxu0 0.0
    %1024 = vmatpush.xpose.msra.mxu0 0.0
    %1025 = vmatpush.xpose.msra.mxu0 0.0
    %1026 = vmatpush.xpose.msra.mxu0 0.0
    %1027 = vmatpush.xpose.msra.mxu0 0.0
    %1028 = vmatpush.xpose.msra.mxu0 0.0
    %1029 = vmatpush.xpose.msra.mxu0 0.0
    %v1030 = vand.u32 %v1016, 4294901760
    %1031 = vmatpush.xpose.msra.mxu0 %v1030
    %v1032 = vand.u32 %v1014, 4294901760
    %1033 = vmatpush.xpose.msra.mxu0 %v1032
    %v1034 = vand.u32 %v1012, 4294901760
    %1035 = vmatpush.xpose.msra.mxu0 %v1034
    %v1036 = vand.u32 %v1010, 4294901760
    %1037 = vmatpush.xpose.msra.mxu0 %v1036
    %v1038 = vand.u32 %v1008, 4294901760
    %v1039 = vsub.f32 %v1008, %v1038
    %v1040 = vand.u32 %v1039, 4294901760
    %v1041 = vsub.f32 %v1039, %v1040
    %v1042 = vand.u32 %v1041, 4294901760
    %1043 = vmatmul.f32.gmra.mxu0 %v1042
    %v1044 = vpop.f32.mrf.mxu0
    %v1045 = vadd.f32 0.0, %v1044
    %1046 = vdwg.mxu0
    %1047 = vmatpush.xpose.msra.mxu0 0.0
    %1048 = vmatpush.xpose.msra.mxu0 0.0
    %1049 = vmatpush.xpose.msra.mxu0 0.0
    %1050 = vmatpush.xpose.msra.mxu0 0.0
    %1051 = vmatpush.xpose.msra.mxu0 0.0
    %1052 = vmatpush.xpose.msra.mxu0 0.0
    %1053 = vmatpush.xpose.msra.mxu0 0.0
    %1054 = vmatpush.xpose.msra.mxu0 0.0
    %1055 = vmatpush.xpose.msra.mxu0 0.0
    %1056 = vmatpush.xpose.msra.mxu0 0.0
    %1057 = vmatpush.xpose.msra.mxu0 0.0
    %1058 = vmatpush.xpose.msra.mxu0 0.0
    %v1059 = vand.u32 %v1016, 4294901760
    %v1060 = vsub.f32 %v1016, %v1059
    %v1061 = vand.u32 %v1060, 4294901760
    %v1062 = vsub.f32 %v1060, %v1061
    %v1063 = vand.u32 %v1062, 4294901760
    %1064 = vmatpush.xpose.msra.mxu0 %v1063
    %v1065 = vand.u32 %v1014, 4294901760
    %v1066 = vsub.f32 %v1014, %v1065
    %v1067 = vand.u32 %v1066, 4294901760
    %v1068 = vsub.f32 %v1066, %v1067
    %v1069 = vand.u32 %v1068, 4294901760
    %1070 = vmatpush.xpose.msra.mxu0 %v1069
    %v1071 = vand.u32 %v1012, 4294901760
    %v1072 = vsub.f32 %v1012, %v1071
    %v1073 = vand.u32 %v1072, 4294901760
    %v1074 = vsub.f32 %v1072, %v1073
    %v1075 = vand.u32 %v1074, 4294901760
    %1076 = vmatpush.xpose.msra.mxu0 %v1075
    %v1077 = vand.u32 %v1010, 4294901760
    %v1078 = vsub.f32 %v1010, %v1077
    %v1079 = vand.u32 %v1078, 4294901760
    %v1080 = vsub.f32 %v1078, %v1079
    %v1081 = vand.u32 %v1080, 4294901760
    %1082 = vmatpush.xpose.msra.mxu0 %v1081
    %v1083 = vand.u32 %v1008, 4294901760
    %1084 = vmatmul.f32.gmra.mxu0 %v1083
    %v1085 = vpop.f32.mrf.mxu0
    %v1086 = vadd.f32 %v1045, %v1085
    %1087 = vdwg.mxu0
    %1088 = vmatpush.xpose.msra.mxu0 0.0
    %1089 = vmatpush.xpose.msra.mxu0 0.0
    %1090 = vmatpush.xpose.msra.mxu0 0.0
    %1091 = vmatpush.xpose.msra.mxu0 0.0
    %1092 = vmatpush.xpose.msra.mxu0 0.0
    %1093 = vmatpush.xpose.msra.mxu0 0.0
    %1094 = vmatpush.xpose.msra.mxu0 0.0
    %1095 = vmatpush.xpose.msra.mxu0 0.0
    %1096 = vmatpush.xpose.msra.mxu0 0.0
    %1097 = vmatpush.xpose.msra.mxu0 0.0
    %1098 = vmatpush.xpose.msra.mxu0 0.0
    %1099 = vmatpush.xpose.msra.mxu0 0.0
    %v1100 = vand.u32 %v1016, 4294901760
    %v1101 = vsub.f32 %v1016, %v1100
    %1102 = vmatpush.xpose.msra.mxu0 %v1101
    %v1103 = vand.u32 %v1014, 4294901760
    %v1104 = vsub.f32 %v1014, %v1103
    %1105 = vmatpush.xpose.msra.mxu0 %v1104
    %v1106 = vand.u32 %v1012, 4294901760
    %v1107 = vsub.f32 %v1012, %v1106
    %1108 = vmatpush.xpose.msra.mxu0 %v1107
    %v1109 = vand.u32 %v1010, 4294901760
    %v1110 = vsub.f32 %v1010, %v1109
    %1111 = vmatpush.xpose.msra.mxu0 %v1110
    %v1112 = vand.u32 %v1008, 4294901760
    %v1113 = vsub.f32 %v1008, %v1112
    %1114 = vmatmul.f32.gmra.mxu0 %v1113
    %v1115 = vpop.f32.mrf.mxu0
    %v1116 = vadd.f32 %v1086, %v1115
    %1117 = vdwg.mxu0
    %1118 = vmatpush.xpose.msra.mxu0 0.0
    %1119 = vmatpush.xpose.msra.mxu0 0.0
    %1120 = vmatpush.xpose.msra.mxu0 0.0
    %1121 = vmatpush.xpose.msra.mxu0 0.0
    %1122 = vmatpush.xpose.msra.mxu0 0.0
    %1123 = vmatpush.xpose.msra.mxu0 0.0
    %1124 = vmatpush.xpose.msra.mxu0 0.0
    %1125 = vmatpush.xpose.msra.mxu0 0.0
    %1126 = vmatpush.xpose.msra.mxu0 0.0
    %1127 = vmatpush.xpose.msra.mxu0 0.0
    %1128 = vmatpush.xpose.msra.mxu0 0.0
    %1129 = vmatpush.xpose.msra.mxu0 0.0
    %v1130 = vand.u32 %v1016, 4294901760
    %1131 = vmatpush.xpose.msra.mxu0 %v1130
    %v1132 = vand.u32 %v1014, 4294901760
    %1133 = vmatpush.xpose.msra.mxu0 %v1132
    %v1134 = vand.u32 %v1012, 4294901760
    %1135 = vmatpush.xpose.msra.mxu0 %v1134
    %v1136 = vand.u32 %v1010, 4294901760
    %1137 = vmatpush.xpose.msra.mxu0 %v1136
    %v1138 = vand.u32 %v1008, 4294901760
    %v1139 = vsub.f32 %v1008, %v1138
    %v1140 = vand.u32 %v1139, 4294901760
    %1141 = vmatmul.f32.gmra.mxu0 %v1140
    %v1142 = vpop.f32.mrf.mxu0
    %v1143 = vadd.f32 %v1116, %v1142
    %1144 = vdwg.mxu0
    %1145 = vmatpush.xpose.msra.mxu0 0.0
    %1146 = vmatpush.xpose.msra.mxu0 0.0
    %1147 = vmatpush.xpose.msra.mxu0 0.0
    %1148 = vmatpush.xpose.msra.mxu0 0.0
    %1149 = vmatpush.xpose.msra.mxu0 0.0
    %1150 = vmatpush.xpose.msra.mxu0 0.0
    %1151 = vmatpush.xpose.msra.mxu0 0.0
    %1152 = vmatpush.xpose.msra.mxu0 0.0
    %1153 = vmatpush.xpose.msra.mxu0 0.0
    %1154 = vmatpush.xpose.msra.mxu0 0.0
    %1155 = vmatpush.xpose.msra.mxu0 0.0
    %1156 = vmatpush.xpose.msra.mxu0 0.0
    %v1157 = vand.u32 %v1016, 4294901760
    %v1158 = vsub.f32 %v1016, %v1157
    %v1159 = vand.u32 %v1158, 4294901760
    %1160 = vmatpush.xpose.msra.mxu0 %v1159
    %v1161 = vand.u32 %v1014, 4294901760
    %v1162 = vsub.f32 %v1014, %v1161
    %v1163 = vand.u32 %v1162, 4294901760
    %1164 = vmatpush.xpose.msra.mxu0 %v1163
    %v1165 = vand.u32 %v1012, 4294901760
    %v1166 = vsub.f32 %v1012, %v1165
    %v1167 = vand.u32 %v1166, 4294901760
    %1168 = vmatpush.xpose.msra.mxu0 %v1167
    %v1169 = vand.u32 %v1010, 4294901760
    %v1170 = vsub.f32 %v1010, %v1169
    %v1171 = vand.u32 %v1170, 4294901760
    %1172 = vmatpush.xpose.msra.mxu0 %v1171
    %v1173 = vand.u32 %v1008, 4294901760
    %1174 = vmatmul.f32.gmra.mxu0 %v1173
    %v1175 = vpop.f32.mrf.mxu0
    %v1176 = vadd.f32 %v1143, %v1175
    %1177 = vdwg.mxu0
    %1178 = vmatpush.xpose.msra.mxu0 0.0
    %1179 = vmatpush.xpose.msra.mxu0 0.0
    %1180 = vmatpush.xpose.msra.mxu0 0.0
    %1181 = vmatpush.xpose.msra.mxu0 0.0
    %1182 = vmatpush.xpose.msra.mxu0 0.0
    %1183 = vmatpush.xpose.msra.mxu0 0.0
    %1184 = vmatpush.xpose.msra.mxu0 0.0
    %1185 = vmatpush.xpose.msra.mxu0 0.0
    %1186 = vmatpush.xpose.msra.mxu0 0.0
    %1187 = vmatpush.xpose.msra.mxu0 0.0
    %1188 = vmatpush.xpose.msra.mxu0 0.0
    %1189 = vmatpush.xpose.msra.mxu0 0.0
    %v1190 = vand.u32 %v1016, 4294901760
    %1191 = vmatpush.xpose.msra.mxu0 %v1190
    %v1192 = vand.u32 %v1014, 4294901760
    %1193 = vmatpush.xpose.msra.mxu0 %v1192
    %v1194 = vand.u32 %v1012, 4294901760
    %1195 = vmatpush.xpose.msra.mxu0 %v1194
    %v1196 = vand.u32 %v1010, 4294901760
    %1197 = vmatpush.xpose.msra.mxu0 %v1196
    %v1198 = vand.u32 %v1008, 4294901760
    %1199 = vmatmul.f32.gmra.mxu0 %v1198
    %v1200 = vpop.f32.mrf.mxu0
    %v1201 = vadd.f32 %v1176, %v1200
    %1202 = vdwg.mxu0
    %1203 = vst.msk [vmem:[#allocation2 + $0x20] sm:$0xff] %vm976, %v1201
    %1205 = vrot.lane.b32.xlu0 %v1201, 120
    %v1206 = vpop.permute.xlu0 %1205
    %1208 = vst.msk [vmem:[#allocation2 + $0x28] sm:$0xff] %vm976, %v1206
    %1209 = vrot.lane.b32.xlu0 %v1201, 112
    %v1210 = vpop.permute.xlu0 %1209
    %1212 = vst.msk [vmem:[#allocation2 + $0x30] sm:$0xff] %vm976, %v1210
    %1213 = vrot.lane.b32.xlu0 %v1201, 104
    %v1214 = vpop.permute.xlu0 %1213
    %1216 = vst.msk [vmem:[#allocation2 + $0x38] sm:$0xff] %vm976, %v1214
    // Predicated region
    $region10: #{_forward_impl.1} parent=1 // pred_check
      _
    $region11: #{_forward_impl.1} parent=1 // pred_check_branch
      %1218 = sbr.rel (0) target = $region13
    $region12: #{_forward_impl.1} parent=1 // pred_region
      %1220 = vsyncadd [#allocation3], 0
      %s1221 = sshll.u32 [#allocation2], 4
      %s1222 = int_to_ptr.vmem [resolvable:$true] %s1221
      %s1223 = sshll.u32 %s2, 4
      %s1224 = int_to_ptr.hbm [resolvable:$true] %s1223
      %1229 = dma.vmem_to_hbm [thread:$0]  %s1222, 1024, %s1224, [#allocation3], 128, 128, 8
    $region13: #{_forward_impl.1} parent=1 // pred_fallthru
      _
    // Predicated region
    $region14: #{_forward_impl.1} parent=1 // pred_check
      _
    $region15: #{_forward_impl.1} parent=1 // pred_check_branch
      %1231 = sbr.rel (0) target = $region17
    $region16: #{_forward_impl.1} parent=1 // pred_region
      %1233 = dma.done [#allocation3], 1024
    $region17: #{_forward_impl.1} parent=1 // pred_fallthru
      _
    %1234 = vsyncpa [#allocation3], 1

</llo_original>
